<compile_context>
chip_gen: v6e
topology: v6e:2x2x1
jax: 0.10.0
libtpu: 0.0.40
codegen_flags: <defaults>
</compile_context>

<pallas_src>
import functools
import math

import jax
import jax.numpy as jnp
from jax.experimental import pallas as pl
from jax.experimental.pallas import tpu as pltpu


def _tpu_limits():
    """Per-generation (streaming tile bytes, scoped-VMEM limit, VMEM capacity)."""
    cap = None
    try:
        info = pltpu.get_tpu_info()
        cap = getattr(info, "vmem_capacity_bytes", None)
    except Exception:
        cap = None
    if not cap or int(cap) < 32 * 1024 * 1024:
        cap = 64 * 1024 * 1024                        # conservative: v7x per-TC VMEM
    cap = int(cap)
    if cap >= 96 * 1024 * 1024:                       # v5e / v6e: 128 MiB VMEM
        return 8 * 1024 * 1024, 64 * 1024 * 1024, cap
    return 4 * 1024 * 1024, 40 * 1024 * 1024, cap     # v7x: 64 MiB per TensorCore


def _clamp_vmem(limit, cap):
    return int(max(16 * 1024 * 1024, min(limit, cap - 8 * 1024 * 1024)))


def _pick_tile(total, base, cap):
    """Largest multiple of `base` dividing `total` that is <= cap; falls back to
    the full extent when `total` is not a multiple of `base`."""
    if total % base != 0:
        return total
    cap = max(base, min(cap - cap % base, total))
    for t in range(cap, base - 1, -base):
        if total % t == 0:
            return t
    return base


def _fused_row_tile(R, C, HW, Nh, base_sub, itemsize, tile_bytes):
    """Row tile for the fused path: a multiple of C (whole batch groups per block),
    a multiple of the sublane base (or the full extent R), divides R, and the
    resident x block stays within the per-tile byte budget.  None -> no fit."""
    def fits(rt):
        return rt * HW * itemsize + 8 * rt * Nh + 4 * rt * rt <= tile_bytes

    base = C * base_sub // math.gcd(C, base_sub)      # lcm(C, sublane base)
    cands = [R] if fits(R) else []
    t = base
    limit = min(R - 1, 32768)                          # bounded trace-time scan
    while t <= limit:
        if R % t == 0 and fits(t):
            cands.append(t)
        t += base
    if not cands:
        return None
    # Prefer >= 2 row blocks so both v7x TensorCores get grid work.
    split = [rt for rt in cands if R // rt >= 2]
    return max(split) if split else max(cands)


# ----------------------------- fused single-pass kernel -------------------------


def _fused_af_kernel(x_ref, snr_ref, w1m_ref, w1s_ref, b1_ref, w2_ref, b2_ref,
                     g_ref, o_ref, *, inv_hw):
    """One resident row block (whole batch groups): mean -> SE-MLP -> scale."""
    x = x_ref[...].astype(jnp.float32)                      # (rt, HW)
    mu = jnp.sum(x, axis=-1, keepdims=True) * inv_hw        # (rt, 1) per-(b, c) mean
    # fc1: group-sum over the C channels of each batch via the block-diagonal ones
    # mask G (MXU), then the rank-1 snr column on the VPU (no K=1 MXU matmul).
    h = jnp.dot(g_ref[...], mu * w1m_ref[...],
                preferred_element_type=jnp.float32)         # (rt, Nh); h[r] = h[batch(r)]
    h = h + snr_ref[...] * w1s_ref[...] + b1_ref[...]
    h = jnp.maximum(h, 0.0)                                 # ReLU
    # fc2 gathered per row: s[r] = sigmoid(<h[r], W2[c(r), :]> + b2[c(r)])
    s = jax.nn.sigmoid(jnp.sum(h * w2_ref[...], axis=-1, keepdims=True)
                       + b2_ref[...])                       # (rt, 1)
    o_ref[...] = (x * s).astype(o_ref.dtype)


# ----------------------------- streaming multi-pass kernels ---------------------


def _mean_kernel_chunked(x_ref, mu_ref, acc_ref, *, inv_hw, n_chunks):
    """Streamed spatial sum: VPU adds of 128-lane chunks into a resident
    (row_tile, 128) accumulator; single XLU lane-reduce only at the finalize."""
    h = pl.program_id(1)

    @pl.when(h == 0)
    def _init():
        acc_ref[...] = jnp.zeros_like(acc_ref)

    x = x_ref[...].astype(jnp.float32)
    psum = x[:, 0:128]
    for c in range(1, n_chunks):
        psum = psum + x[:, c * 128:(c + 1) * 128]
    acc_ref[...] += psum

    @pl.when(h == pl.num_programs(1) - 1)
    def _finalize():
        mu_ref[...] = jnp.sum(acc_ref[...], axis=-1, keepdims=True) * inv_hw


def _mean_kernel_simple(x_ref, mu_ref, *, inv_hw):
    """Fallback when H*W is not a multiple of 128: reduce each streamed tile."""
    h = pl.program_id(1)

    @pl.when(h == 0)
    def _init():
        mu_ref[...] = jnp.zeros_like(mu_ref)

    mu_ref[...] += jnp.sum(x_ref[...].astype(jnp.float32), axis=-1, keepdims=True)

    @pl.when(h == pl.num_programs(1) - 1)
    def _finalize():
        mu_ref[...] *= inv_hw


def _scale_kernel(x_ref, s_ref, o_ref):
    """Stream a lane-dense x tile and rescale each (b, c) row by its scalar."""
    o_ref[...] = (x_ref[...].astype(jnp.float32) * s_ref[...]).astype(o_ref.dtype)


# ----------------------------- wrapper -------------------------------------------


def af_block(x, snr, w1, b1, w2, b2, *, force_multipass=False):
    """Pallas forward of AF_block.  x: (B, C, H, W); snr: (B,) or (B, 1);
    w1: (Nh, C+1), b1: (Nh,), w2: (C, Nh), b2: (C,)."""
    B, C, H, W = x.shape
    Nh = w1.shape[0]
    assert w1.shape[1] - 1 == C and w2.shape[0] == C, "AF_block requires Nin == No == C"

    HW = H * W
    R = B * C
    dtype = x.dtype
    itemsize = jnp.dtype(dtype).itemsize
    base_sub = 8 if itemsize >= 4 else 16              # sublane packing (f32 vs bf16)

    # Lane/sublane-dense layout: rows = B*C (sublanes), lanes = H*W.
    x2 = x.reshape(R, HW)
    snr_b = snr.reshape(B).astype(jnp.float32)
    w1f = w1.astype(jnp.float32)
    b1f = b1.astype(jnp.float32)
    w2f = w2.astype(jnp.float32)
    b2f = b2.astype(jnp.float32)

    tile_bytes, vmem_limit, vmem_cap = _tpu_limits()
    inv_hw = 1.0 / float(HW)

    # ---------------- fused single-pass path: x row blocks stay resident ---------
    rt = None if force_multipass else _fused_row_tile(R, C, HW, Nh, base_sub,
                                                      itemsize, tile_bytes)
    if rt is not None:
        c_idx = jnp.arange(R) % C                          # channel id per row
        w1m_rows = jnp.transpose(w1f[:, :C])[c_idx]        # (R, Nh): W1[:, c(r)]
        w1s_row = jnp.transpose(w1f[:, C:])                # (1, Nh): snr column of W1
        b1_row = b1f.reshape(1, Nh)
        w2_rows = w2f[c_idx]                               # (R, Nh): W2[c(r), :]
        b2_rows = b2f[c_idx].reshape(R, 1)
        snr_rows = jnp.repeat(snr_b, C).reshape(R, 1)      # snr[batch(r)]
        ri = jnp.arange(rt)
        g_mat = (ri[:, None] // C == ri[None, :] // C).astype(jnp.float32)  # (rt, rt)

        footprint = (4 * rt * HW * itemsize + 16 * rt * Nh + 8 * rt * rt
                     + 4 * 1024 * 1024)
        vlimit = _clamp_vmem(max(vmem_limit, footprint), vmem_cap)

        row_blk = pl.BlockSpec((rt, HW), lambda r: (r, 0))
        col_blk = pl.BlockSpec((rt, 1), lambda r: (r, 0))
        nh_blk = pl.BlockSpec((rt, Nh), lambda r: (r, 0))
        nh_const = pl.BlockSpec((1, Nh), lambda r: (0, 0))
        g_blk = pl.BlockSpec((rt, rt), lambda r: (0, 0))

        out = pl.pallas_call(
            functools.partial(_fused_af_kernel, inv_hw=inv_hw),
            out_shape=jax.ShapeDtypeStruct((R, HW), dtype),
            grid=(R // rt,),
            in_specs=[row_blk, col_blk, nh_blk, nh_const, nh_const, nh_blk,
                      col_blk, g_blk],
            out_specs=row_blk,
            compiler_params=pltpu.CompilerParams(
                dimension_semantics=("parallel",),
                vmem_limit_bytes=vlimit),
        )(x2, snr_rows, w1m_rows, w1s_row, b1_row, w2_rows, b2_rows, g_mat)
        return out.reshape(B, C, H, W)

    # ---------------- streaming multi-pass fallback -------------------------------
    lane_cap = min(8192, max(128, tile_bytes // (8 * itemsize)))
    lane_tile = _pick_tile(HW, 128, lane_cap)
    row_cap = max(base_sub, tile_bytes // max(1, lane_tile * itemsize))
    if R >= 2 * base_sub and R % (2 * base_sub) == 0:
        row_cap = min(row_cap, R // 2)                     # >= 2 parallel row blocks (v7x)
    row_tile = _pick_tile(R, base_sub, row_cap)
    grid = (R // row_tile, HW // lane_tile)

    blk_bytes = row_tile * lane_tile * itemsize
    vlimit = _clamp_vmem(max(vmem_limit, 6 * blk_bytes + 4 * 1024 * 1024), vmem_cap)

    x_spec = pl.BlockSpec((row_tile, lane_tile), lambda r, h: (r, h))
    col_spec = pl.BlockSpec((row_tile, 1), lambda r, h: (r, 0))

    # Pass 1: per-(B, C) spatial mean; reduction axis last, resident accumulator.
    if lane_tile % 128 == 0:
        mean_kernel = functools.partial(_mean_kernel_chunked, inv_hw=inv_hw,
                                        n_chunks=lane_tile // 128)
        scratch = [pltpu.VMEM((row_tile, 128), jnp.float32)]
    else:
        mean_kernel = functools.partial(_mean_kernel_simple, inv_hw=inv_hw)
        scratch = []
    mu = pl.pallas_call(
        mean_kernel,
        out_shape=jax.ShapeDtypeStruct((R, 1), jnp.float32),
        grid=grid,
        in_specs=[x_spec],
        out_specs=col_spec,
        scratch_shapes=scratch,
        compiler_params=pltpu.CompilerParams(
            dimension_semantics=("parallel", "arbitrary"),
            vmem_limit_bytes=vlimit),
    )(x2)

    # Tiny SE-MLP in plain jnp: a few KB of math that XLA fuses; a dedicated kernel
    # launch (or an MXU K=1 matmul for the snr column) would cost more than the math.
    cat = jnp.concatenate([mu.reshape(B, C), snr_b.reshape(B, 1)], axis=1)
    hmid = jnp.maximum(cat @ w1f.T + b1f, 0.0)
    s = jax.nn.sigmoid(hmid @ w2f.T + b2f)                 # (B, C)

    # Pass 2: stream x again and rescale each (b, c) row (lane-dense stores).
    out = pl.pallas_call(
        _scale_kernel,
        out_shape=jax.ShapeDtypeStruct((R, HW), dtype),
        grid=grid,
        in_specs=[x_spec, col_spec],
        out_specs=x_spec,
        compiler_params=pltpu.CompilerParams(
            dimension_semantics=("parallel", "parallel"),
            vmem_limit_bytes=vlimit),
    )(x2, s.reshape(R, 1))
    return out.reshape(B, C, H, W)


def af_block_ref(x, snr, w1, b1, w2, b2):
    """Pure-JAX reference of the PyTorch forward, for verification."""
    B = x.shape[0]
    snr2 = snr.reshape(B, 1).astype(jnp.float32)
    mu = jnp.mean(x.astype(jnp.float32), axis=(2, 3))
    cat = jnp.concatenate([mu, snr2], axis=1)
    h = jnp.maximum(cat @ w1.T + b1, 0.0)
    s = jax.nn.sigmoid(h @ w2.T + b2)
    return (s[:, :, None, None] * x.astype(jnp.float32)).astype(x.dtype)


if __name__ == "__main__":
    # Small shapes consistent with the module: Nin = C, No = C (so the final
    # broadcast multiply is well-defined).
    B, C, H, W = 2, 4, 16, 16
    Nin, Nh, No = C, 32, C

    key = jax.random.PRNGKey(0)
    kx, ks, k1, k2, k3, k4 = jax.random.split(key, 6)

    x = jax.random.normal(kx, (B, C, H, W), dtype=jnp.float32)
    snr = jax.random.uniform(ks, (B,), dtype=jnp.float32, minval=0.0, maxval=20.0)

    # Deterministic PyTorch-style (Kaiming-uniform-ish) Linear init.
    bound1 = 1.0 / jnp.sqrt(jnp.float32(Nin + 1))
    w1 = jax.random.uniform(k1, (Nh, Nin + 1), jnp.float32, -bound1, bound1)
    b1 = jax.random.uniform(k2, (Nh,), jnp.float32, -bound1, bound1)
    bound2 = 1.0 / jnp.sqrt(jnp.float32(Nh))
    w2 = jax.random.uniform(k3, (No, Nh), jnp.float32, -bound2, bound2)
    b2 = jax.random.uniform(k4, (No,), jnp.float32, -bound2, bound2)

    ref = af_block_ref(x, snr, w1, b1, w2, b2)

    # Fused single-pass path (the one used for SE-sized feature maps).
    fused_fn = jax.jit(af_block)
    out_fused = jax.block_until_ready(fused_fn(x, snr, w1, b1, w2, b2))
    assert out_fused.shape == (B, C, H, W)
    assert jnp.allclose(out_fused, ref, atol=1e-5, rtol=1e-5), "fused path mismatch"

    # Streaming multi-pass fallback (used when x is too large to keep resident).
    multi_fn = jax.jit(functools.partial(af_block, force_multipass=True))
    out_multi = jax.block_until_ready(multi_fn(x, snr, w1, b1, w2, b2))
    assert jnp.allclose(out_multi, ref, atol=1e-5, rtol=1e-5), "multipass mismatch"

    print("KERNEL_OK")
</pallas_src>

<mosaic_0001>
module attributes {stable_mosaic.version = 11 : i64} {
  func.func @_fused_af_kernel(%arg0: i32, %arg1: memref<8x256xf32, #tpu.memory_space<vmem>>, %arg2: memref<8x1xf32, #tpu.memory_space<vmem>>, %arg3: memref<8x32xf32, #tpu.memory_space<vmem>>, %arg4: memref<1x32xf32, #tpu.memory_space<vmem>>, %arg5: memref<1x32xf32, #tpu.memory_space<vmem>>, %arg6: memref<8x32xf32, #tpu.memory_space<vmem>>, %arg7: memref<8x1xf32, #tpu.memory_space<vmem>>, %arg8: memref<8x8xf32, #tpu.memory_space<vmem>>, %arg9: memref<8x256xf32, #tpu.memory_space<vmem>>) attributes {dimension_semantics = [#tpu.dimension_semantics<parallel>], iteration_bounds = array<i64: 1>, scalar_prefetch = 0 : i64, scratch_operands = 0 : i64, tpu.core_type = #tpu.core_type<tc>, window_params = [{transform_indices = @transform_0, window_bounds = array<i64: 8, 256>}, {transform_indices = @transform_1, window_bounds = array<i64: 8, 1>}, {transform_indices = @transform_2, window_bounds = array<i64: 8, 32>}, {pipeline_mode = #tpu.pipeline_mode<synchronous>, transform_indices = @transform_3, window_bounds = array<i64: 1, 32>}, {pipeline_mode = #tpu.pipeline_mode<synchronous>, transform_indices = @transform_4, window_bounds = array<i64: 1, 32>}, {transform_indices = @transform_5, window_bounds = array<i64: 8, 32>}, {transform_indices = @transform_6, window_bounds = array<i64: 8, 1>}, {pipeline_mode = #tpu.pipeline_mode<synchronous>, transform_indices = @transform_7, window_bounds = array<i64: 8, 8>}, {transform_indices = @transform_8, window_bounds = array<i64: 8, 256>}]} {
    %c0 = arith.constant 0 : index
    %c0_0 = arith.constant 0 : index
    %0 = vector.load %arg1[%c0, %c0_0] : memref<8x256xf32, #tpu.memory_space<vmem>>, vector<8x256xf32>
    %cst = arith.constant dense<0.000000e+00> : vector<8xf32>
    %1 = vector.multi_reduction <add>, %0, %cst [1] : vector<8x256xf32> to vector<8xf32>
    %2 = vector.shape_cast %1 : vector<8xf32> to vector<8x1xf32>
    %cst_1 = arith.constant 3.906250e-03 : f32
    %3 = vector.broadcast %cst_1 : f32 to vector<8x1xf32>
    %4 = arith.mulf %2, %3 : vector<8x1xf32>
    %c0_2 = arith.constant 0 : index
    %c0_3 = arith.constant 0 : index
    %5 = vector.load %arg8[%c0_2, %c0_3] : memref<8x8xf32, #tpu.memory_space<vmem>>, vector<8x8xf32>
    %c0_4 = arith.constant 0 : index
    %c0_5 = arith.constant 0 : index
    %6 = vector.load %arg3[%c0_4, %c0_5] : memref<8x32xf32, #tpu.memory_space<vmem>>, vector<8x32xf32>
    %7 = vector.broadcast %4 : vector<8x1xf32> to vector<8x32xf32>
    %8 = arith.mulf %7, %6 : vector<8x32xf32>
    %cst_6 = arith.constant dense<0.000000e+00> : vector<8x32xf32>
    %9 = tpu.matmul %5, %8, %cst_6 {dimension_numbers = #tpu.dot_dimension_numbers<[1], [0], [0], [1], [0, 0, 1, 1], [], []>} : vector<8x8xf32>, vector<8x32xf32>, vector<8x32xf32> -> vector<8x32xf32>
    %c0_7 = arith.constant 0 : index
    %c0_8 = arith.constant 0 : index
    %10 = vector.load %arg2[%c0_7, %c0_8] : memref<8x1xf32, #tpu.memory_space<vmem>>, vector<8x1xf32>
    %c0_9 = arith.constant 0 : index
    %c0_10 = arith.constant 0 : index
    %11 = vector.load %arg4[%c0_9, %c0_10] : memref<1x32xf32, #tpu.memory_space<vmem>>, vector<1x32xf32>
    %12 = vector.broadcast %10 : vector<8x1xf32> to vector<8x32xf32>
    %13 = vector.broadcast %11 : vector<1x32xf32> to vector<8x32xf32>
    %14 = arith.mulf %12, %13 : vector<8x32xf32>
    %15 = arith.addf %9, %14 : vector<8x32xf32>
    %c0_11 = arith.constant 0 : index
    %c0_12 = arith.constant 0 : index
    %16 = vector.load %arg5[%c0_11, %c0_12] : memref<1x32xf32, #tpu.memory_space<vmem>>, vector<1x32xf32>
    %17 = vector.broadcast %16 : vector<1x32xf32> to vector<8x32xf32>
    %18 = arith.addf %15, %17 : vector<8x32xf32>
    %cst_13 = arith.constant 0.000000e+00 : f32
    %19 = vector.broadcast %cst_13 : f32 to vector<8x32xf32>
    %20 = arith.maximumf %18, %19 : vector<8x32xf32>
    %c0_14 = arith.constant 0 : index
    %c0_15 = arith.constant 0 : index
    %21 = vector.load %arg6[%c0_14, %c0_15] : memref<8x32xf32, #tpu.memory_space<vmem>>, vector<8x32xf32>
    %22 = arith.mulf %20, %21 : vector<8x32xf32>
    %cst_16 = arith.constant dense<0.000000e+00> : vector<8xf32>
    %23 = vector.multi_reduction <add>, %22, %cst_16 [1] : vector<8x32xf32> to vector<8xf32>
    %24 = vector.shape_cast %23 : vector<8xf32> to vector<8x1xf32>
    %c0_17 = arith.constant 0 : index
    %c0_18 = arith.constant 0 : index
    %25 = vector.load %arg7[%c0_17, %c0_18] : memref<8x1xf32, #tpu.memory_space<vmem>>, vector<8x1xf32>
    %26 = arith.addf %24, %25 : vector<8x1xf32>
    %27 = arith.negf %26 : vector<8x1xf32>
    %28 = math.exp %27 : vector<8x1xf32>
    %cst_19 = arith.constant 1.000000e+00 : f32
    %29 = vector.broadcast %cst_19 : f32 to vector<8x1xf32>
    %30 = arith.addf %29, %28 : vector<8x1xf32>
    %31 = arith.divf %29, %30 : vector<8x1xf32>
    %32 = vector.broadcast %31 : vector<8x1xf32> to vector<8x256xf32>
    %33 = arith.mulf %0, %32 : vector<8x256xf32>
    %c0_20 = arith.constant 0 : index
    %c0_21 = arith.constant 0 : index
    %34 = vector.load %arg9[%c0_20, %c0_21] : memref<8x256xf32, #tpu.memory_space<vmem>>, vector<8x256xf32>
    tpu.vector_store %arg9[%c0_20, %c0_21], %33 {strides = array<i32>} : memref<8x256xf32, #tpu.memory_space<vmem>>, vector<8x256xf32>,
    return
  }
  func.func @transform_0(%arg0: i32) -> (i32, i32) {
    %c0_i32 = arith.constant 0 : i32
    %c0_i32_0 = arith.constant 0 : i32
    return %arg0, %c0_i32 : i32, i32
  }
  func.func @transform_1(%arg0: i32) -> (i32, i32) {
    %c0_i32 = arith.constant 0 : i32
    %c0_i32_0 = arith.constant 0 : i32
    return %arg0, %c0_i32 : i32, i32
  }
  func.func @transform_2(%arg0: i32) -> (i32, i32) {
    %c0_i32 = arith.constant 0 : i32
    %c0_i32_0 = arith.constant 0 : i32
    return %arg0, %c0_i32 : i32, i32
  }
  func.func @transform_3(%arg0: i32) -> (i32, i32) {
    %c0_i32 = arith.constant 0 : i32
    %c0_i32_0 = arith.constant 0 : i32
    %c0_i32_1 = arith.constant 0 : i32
    return %c0_i32, %c0_i32_0 : i32, i32
  }
  func.func @transform_4(%arg0: i32) -> (i32, i32) {
    %c0_i32 = arith.constant 0 : i32
    %c0_i32_0 = arith.constant 0 : i32
    %c0_i32_1 = arith.constant 0 : i32
    return %c0_i32, %c0_i32_0 : i32, i32
  }
  func.func @transform_5(%arg0: i32) -> (i32, i32) {
    %c0_i32 = arith.constant 0 : i32
    %c0_i32_0 = arith.constant 0 : i32
    return %arg0, %c0_i32 : i32, i32
  }
  func.func @transform_6(%arg0: i32) -> (i32, i32) {
    %c0_i32 = arith.constant 0 : i32
    %c0_i32_0 = arith.constant 0 : i32
    return %arg0, %c0_i32 : i32, i32
  }
  func.func @transform_7(%arg0: i32) -> (i32, i32) {
    %c0_i32 = arith.constant 0 : i32
    %c0_i32_0 = arith.constant 0 : i32
    %c0_i32_1 = arith.constant 0 : i32
    return %c0_i32, %c0_i32_0 : i32, i32
  }
  func.func @transform_8(%arg0: i32) -> (i32, i32) {
    %c0_i32 = arith.constant 0 : i32
    %c0_i32_0 = arith.constant 0 : i32
    return %arg0, %c0_i32 : i32, i32
  }
}

</mosaic_0001>

<llo_original>
// kernel: af_block.1
$region0: #{af_block.1}
  #allocation0 [shape = 'u32[]', space=smem, size = 0x4, offset = 0x4, fixed_abs, tag = 'smem constant byte address 0x4 - core index']
  #allocation1 [shape = 'u32[144,128]{1,0:T(1,128)}', space=vmem, size = 0x12000, scoped, tag = 'internal scratch']
  %s0 = inlined_call_operand.vmem [shape: f32[8,256], index: 0, kind: input, shape index: {}]
  %s1 = inlined_call_operand.vmem [shape: f32[8,1], index: 1, kind: input, shape index: {}]
  %s2 = inlined_call_operand.vmem [shape: f32[8,32], index: 2, kind: input, shape index: {}]
  %s3 = inlined_call_operand.vmem [shape: f32[1,32], index: 3, kind: input, shape index: {}]
  %s4 = inlined_call_operand.vmem [shape: f32[1,32], index: 4, kind: input, shape index: {}]
  %s5 = inlined_call_operand.vmem [shape: f32[8,32], index: 5, kind: input, shape index: {}]
  %s6 = inlined_call_operand.vmem [shape: f32[8,1], index: 6, kind: input, shape index: {}]
  %s7 = inlined_call_operand.vmem [shape: f32[8,8], index: 7, kind: input, shape index: {}]
  %s8 = inlined_call_operand.vmem [shape: f32[8,256], index: 8, kind: output, shape index: {}]
  %s9 = sld [smem:[#allocation0]]
  $region42: #{af_block.1} parent=0
    _
  %s11 = ssub.s32 1, %s9
  %s12 = scalar_select 0, %s11, %s9
  // Predicated region
  $region2: #{af_block.1} parent=0 // pred_check
    _
  $region3: #{af_block.1} parent=0 // pred_check_branch
    %14 = sbr.rel (0) target = $region5
  $region4: #{af_block.1} parent=0 // pred_region
    _
  $region5: #{af_block.1} parent=0 // pred_fallthru
    _
  // Predicated region
  $region6: #{af_block.1} parent=0 // pred_check
    _
  $region7: #{af_block.1} parent=0 // pred_check_branch
    %16 = sbr.rel (0) target = $region9
  $region8: #{af_block.1} parent=0 // pred_region
    _
  $region9: #{af_block.1} parent=0 // pred_fallthru
    _
  // Predicated region
  $region10: #{af_block.1} parent=0 // pred_check
    _
  $region11: #{af_block.1} parent=0 // pred_check_branch
    %18 = sbr.rel (0) target = $region13
  $region12: #{af_block.1} parent=0 // pred_region
    _
  $region13: #{af_block.1} parent=0 // pred_fallthru
    _
  // Predicated region
  $region14: #{af_block.1} parent=0 // pred_check
    _
  $region15: #{af_block.1} parent=0 // pred_check_branch
    %20 = sbr.rel (0) target = $region17
  $region16: #{af_block.1} parent=0 // pred_region
    _
  $region17: #{af_block.1} parent=0 // pred_fallthru
    _
  // Predicated region
  $region18: #{af_block.1} parent=0 // pred_check
    _
  $region19: #{af_block.1} parent=0 // pred_check_branch
    %22 = sbr.rel (0) target = $region21
  $region20: #{af_block.1} parent=0 // pred_region
    _
  $region21: #{af_block.1} parent=0 // pred_fallthru
    _
  // Predicated region
  $region22: #{af_block.1} parent=0 // pred_check
    _
  $region23: #{af_block.1} parent=0 // pred_check_branch
    %24 = sbr.rel (0) target = $region25
  $region24: #{af_block.1} parent=0 // pred_region
    _
  $region25: #{af_block.1} parent=0 // pred_fallthru
    _
  // Predicated region
  $region26: #{af_block.1} parent=0 // pred_check
    _
  $region27: #{af_block.1} parent=0 // pred_check_branch
    %26 = sbr.rel (0) target = $region29
  $region28: #{af_block.1} parent=0 // pred_region
    _
  $region29: #{af_block.1} parent=0 // pred_fallthru
    _
  // Predicated region
  $region30: #{af_block.1} parent=0 // pred_check
    _
  $region31: #{af_block.1} parent=0 // pred_check_branch
    %28 = sbr.rel (0) target = $region33
  $region32: #{af_block.1} parent=0 // pred_region
    _
  $region33: #{af_block.1} parent=0 // pred_fallthru
    _
  %v29 = vld [vmem:[%s0] sm:$0xff]
  %v30 = vld [vmem:[%s0 + $0x8] sm:$0xff]
  %v31 = vadd.f32 %v29, %v30
  %32 = vadd.xlane.f32.xlu0 %v31
  %v33 = vpop.xlane.xlu0 %32
  %v34 = vmul.f32 %v33, 0.00390625
  %v35 = vld [vmem:[%s7] sm:$0xff]
  %v36 = vld [vmem:[%s2] sm:$0xff]
  %v37 = vmul.f32 %v34, %v36
  %v38 = vld [vmem:[%s1] sm:$0xff]
  %v39 = vld [vmem:[%s3] sm:$0x1]
  %41 = vset.pattern.permute.xlu0 0
  %42 = vperm.xlu0 %41, %v38
  %v43 = vpop.permute.xlu0 %42
  %v46 = vlaneseq
  %v47 = vshrl.u32 %v46, 7
  %v48 = vsub.s32 0, %v47
  %v49 = vrot.slane %v39, %v48
  %v51 = vmul.f32 %v43, %v49
  %vm52 = vcmask 64512
  %v54 = vsel %vm52, %v35, 0
  %56 = vmatprep.subr.mxu0 0.0
  %57 = vmatpush1.msra.mxu0 0.0
  %58 = vmatprep.subr.mxu0 0.0
  %59 = vmatpush1.msra.mxu0 0.0
  %60 = vmatprep.subr.mxu0 0.0
  %61 = vmatpush1.msra.mxu0 0.0
  %62 = vmatprep.subr.mxu0 0.0
  %63 = vmatpush1.msra.mxu0 0.0
  %64 = vmatprep.subr.mxu0 0.0
  %65 = vmatpush1.msra.mxu0 0.0
  %66 = vmatprep.subr.mxu0 0.0
  %67 = vmatpush1.msra.mxu0 0.0
  %68 = vmatprep.subr.mxu0 0.0
  %69 = vmatpush1.msra.mxu0 0.0
  %70 = vmatprep.subr.mxu0 0.0
  %71 = vmatpush1.msra.mxu0 0.0
  %72 = vmatprep.subr.mxu0 0.0
  %73 = vmatpush1.msra.mxu0 0.0
  %74 = vmatprep.subr.mxu0 0.0
  %75 = vmatpush1.msra.mxu0 0.0
  %76 = vmatprep.subr.mxu0 0.0
  %77 = vmatpush1.msra.mxu0 0.0
  %78 = vmatprep.subr.mxu0 0.0
  %79 = vmatpush1.msra.mxu0 0.0
  %80 = vmatprep.subr.mxu0 0.0
  %81 = vmatpush1.msra.mxu0 0.0
  %82 = vmatprep.subr.mxu0 0.0
  %83 = vmatpush1.msra.mxu0 0.0
  %84 = vmatprep.subr.mxu0 0.0
  %85 = vmatpush1.msra.mxu0 0.0
  %86 = vmatprep.subr.mxu0 0.0
  %87 = vmatpush1.msra.mxu0 %v37
  %88 = vmatprep.subr.mxu0 0.0
  %89 = vmatpush2.msra.mxu0 0.0
  %90 = vmatprep.subr.mxu0 0.0
  %91 = vmatpush2.msra.mxu0 0.0
  %92 = vmatprep.subr.mxu0 0.0
  %93 = vmatpush2.msra.mxu0 0.0
  %94 = vmatprep.subr.mxu0 0.0
  %95 = vmatpush2.msra.mxu0 0.0
  %96 = vmatprep.subr.mxu0 0.0
  %97 = vmatpush2.msra.mxu0 0.0
  %98 = vmatprep.subr.mxu0 0.0
  %99 = vmatpush2.msra.mxu0 0.0
  %100 = vmatprep.subr.mxu0 0.0
  %101 = vmatpush2.msra.mxu0 0.0
  %102 = vmatprep.subr.mxu0 0.0
  %103 = vmatpush2.msra.mxu0 0.0
  %104 = vmatprep.subr.mxu0 0.0
  %105 = vmatpush2.msra.mxu0 0.0
  %106 = vmatprep.subr.mxu0 0.0
  %107 = vmatpush2.msra.mxu0 0.0
  %108 = vmatprep.subr.mxu0 0.0
  %109 = vmatpush2.msra.mxu0 0.0
  %110 = vmatprep.subr.mxu0 0.0
  %111 = vmatpush2.msra.mxu0 0.0
  %112 = vmatprep.subr.mxu0 0.0
  %113 = vmatpush2.msra.mxu0 0.0
  %114 = vmatprep.subr.mxu0 0.0
  %115 = vmatpush2.msra.mxu0 0.0
  %116 = vmatprep.subr.mxu0 0.0
  %117 = vmatpush2.msra.mxu0 0.0
  %118 = vmatprep.subr.mxu0 0.0
  %119 = vmatpush2.msra.mxu0 0.0
  %120 = vmatprep.mubr.f32.mxu0 0.0
  %121 = vmatmul.mubr.f32.gmra.mxu0 %v54
  %v122 = vpop.f32.mrf.mxu0
  %v123 = vadd.f32 %v51, %v122
  %v124 = vpop.f32.mrf.mxu0
  %125 = vdwg.mxu0
  %v126 = vld [vmem:[%s4] sm:$0x1]
  %v128 = vlaneseq
  %v129 = vshrl.u32 %v128, 7
  %v130 = vsub.s32 0, %v129
  %v131 = vrot.slane %v126, %v130
  %v133 = vadd.f32 %v123, %v131
  %v134 = vmax.f32 %v133, 0.0
  %v135 = vld [vmem:[%s5] sm:$0xff]
  %v136 = vmul.f32 %v134, %v135
  %vm137 = vcmask 261120
  %v138 = vsel %vm137, %v136, 0.0
  %139 = vadd.xlane.f32.xlu0 %v138
  %v140 = vpop.xlane.xlu0 %139
  %v141 = vld [vmem:[%s6] sm:$0xff]
  %v142 = vadd.f32 %v140, %v141
  %v143 = vxor.u32 %v142, 2147483648
  %v144 = vmul.f32 %v143, 1.442695
  %v145 = vpow.pop %v144
  %v146 = vadd.f32 %v145, 1.0
  %v147 = vrcp.pop %v146
  %v148 = vmul.f32 1.0, %v147
  %150 = vset.pattern.permute.xlu0 0
  %151 = vperm.xlu0 %150, %v148
  %v152 = vpop.permute.xlu0 %151
  %v154 = vmul.f32 %v29, %v152
  %v155 = vmul.f32 %v30, %v152
  %156 = vst [vmem:[%s8] sm:$0xff] %v154
  %157 = vst [vmem:[%s8 + $0x8] sm:$0xff] %v155
  // Predicated region
  $region34: #{af_block.1} parent=0 // pred_check
    _
  $region35: #{af_block.1} parent=0 // pred_check_branch
    %159 = sbr.rel (0) target = $region37
  $region36: #{af_block.1} parent=0 // pred_region
    _
  $region37: #{af_block.1} parent=0 // pred_fallthru
    _
  // Predicated region
  $region38: #{af_block.1} parent=0 // pred_check
    _
  $region39: #{af_block.1} parent=0 // pred_check_branch
    %161 = sbr.rel (0) target = $region41
  $region40: #{af_block.1} parent=0 // pred_region
    _
  $region41: #{af_block.1} parent=0 // pred_fallthru
    _

</llo_original>
